<compile_context>
chip_gen: v7x
topology: tpu7x:2x2x1
jax: 0.10.0
libtpu: 0.0.40
codegen_flags: <defaults>
</compile_context>

<pallas_src>
import functools

import jax
import jax.numpy as jnp
from jax.experimental import pallas as pl
from jax.experimental.pallas import tpu as pltpu


_INF = float("inf")               # Python float: kernels must not capture device constants
_VALID_THRESH = 1e30              # knn sq-distance >= this -> invalid (padded / cross-batch)
_VMEM_LIMIT = 48 * 1024 * 1024    # fits under v7x's 64 MiB physical VMEM; headroom on v5e/v6e


def _round_up(x, m):
    return ((x + m - 1) // m) * m


# ---------------------------------------------------------------------------
# Kernel 1: fused batch-masked pairwise distance + running top-K (KNN grouper)
# ---------------------------------------------------------------------------
def _knn_kernel(n_valid, k, new_ref, ptT_ref, idx_ref, dst_ref, topd_ref, topi_ref):
    # new_ref : [TM, 5]   sampled points, columns (x, y, z, ||xyz||^2, batch)
    # ptT_ref : [5, TN]   input points (same columns), transposed
    # idx_ref : [TM, K]   int32 neighbor indices      (written on the last N tile)
    # dst_ref : [TM, K]   f32 squared distances       (written on the last N tile)
    # topd_ref: [TM, 128] scratch: cols 0..k-1 running top-k dists, cols k..2k-1 staging
    # topi_ref: [TM, 128] scratch: matching indices stored as f32 (exact for N < 2^24)
    nj = pl.program_id(1)
    tm = new_ref.shape[0]
    tn = ptT_ref.shape[1]

    @pl.when(nj == 0)
    def _init():
        topd_ref[...] = jnp.full(topd_ref.shape, _INF, topd_ref.dtype)
        topi_ref[...] = jnp.zeros(topi_ref.shape, topi_ref.dtype)

    # Hoisted per-tile constants (shared by every 8-row strip).
    pt_x = ptT_ref[0:1, :]                     # [1, TN]
    pt_y = ptT_ref[1:2, :]
    pt_z = ptT_ref[2:3, :]
    pt_sq = ptT_ref[3:4, :]
    pt_b = ptT_ref[4:5, :]
    col_i = jax.lax.broadcasted_iota(jnp.int32, (8, tn), 1) + nj * tn      # global col ids
    col_f = col_i.astype(jnp.float32)
    pad_mask = col_i >= n_valid                                            # padded columns

    def strip_body(s, carry):
        off = pl.multiple_of(s * 8, 8)
        pts = new_ref[pl.ds(off, 8), :]                                    # [8, 5]
        nx, ny, nz = pts[:, 0:1], pts[:, 1:2], pts[:, 2:3]
        nsq, nb = pts[:, 3:4], pts[:, 4:5]

        # ||a - b||^2 = ||a||^2 + ||b||^2 - 2 a.b ; cross term as 3 VPU broadcast-FMAs.
        cross = nx * pt_x + ny * pt_y + nz * pt_z                          # [8, TN]
        d = jnp.maximum(nsq + pt_sq - 2.0 * cross, 0.0)
        d = jnp.where(nb != pt_b, _INF, d)                                 # batch mask
        d = jnp.where(pad_mask, _INF, d)                                   # padding mask

        # Tile-local top-k (2 cross-lane reductions per pick) -> staging cols k..2k-1.
        for j in range(k):
            cur = jnp.min(d, axis=1, keepdims=True)                        # [8, 1]
            sel = jnp.min(jnp.where(d == cur, col_f, _INF), axis=1, keepdims=True)
            topd_ref[pl.ds(off, 8), k + j:k + j + 1] = cur
            topi_ref[pl.ds(off, 8), k + j:k + j + 1] = sel
            d = jnp.where(col_f == sel, _INF, d)

        # Merge running top-k (cols 0..k-1) with this tile's staging (cols k..2k-1).
        # Candidate indices are unique (disjoint column ranges across N tiles), so the
        # index-equality pick is exact; padded cols carry (inf, 0) and never win.
        cd = topd_ref[pl.ds(off, 8), :]                                    # [8, 128]
        ci = topi_ref[pl.ds(off, 8), :]
        new_d, new_i = [], []
        for j in range(k):
            cur = jnp.min(cd, axis=1, keepdims=True)
            sel = jnp.min(jnp.where(cd == cur, ci, _INF), axis=1, keepdims=True)
            new_d.append(cur)
            new_i.append(sel)
            cd = jnp.where(ci == sel, _INF, cd)
        for j in range(k):
            topd_ref[pl.ds(off, 8), j:j + 1] = new_d[j]
            topi_ref[pl.ds(off, 8), j:j + 1] = new_i[j]
        return carry

    jax.lax.fori_loop(0, tm // 8, strip_body, 0)

    @pl.when(nj == pl.num_programs(1) - 1)
    def _emit():
        idx_ref[...] = topi_ref[:, 0:k].astype(jnp.int32)
        dst_ref[...] = topd_ref[:, 0:k]


def knn(new_bxyz, point_bxyz, k, *, tile_m=128, tile_n=512):
    """Batch-aware K nearest input points for every sampled point.

    Returns (knn_idx [M, K] int32, knn_sqdist [M, K] f32).  Slots beyond the number
    of same-batch points carry +inf distance (index undefined) and must be masked.
    """
    M = new_bxyz.shape[0]
    N = point_bxyz.shape[0]
    assert 2 * k <= 128, "k must be <= 64 (running + staging candidates fit 128 lanes)"

    tm = min(tile_m, _round_up(M, 8))
    tn = min(tile_n, _round_up(N, 128))
    m_pad = _round_up(M, tm)
    n_pad = _round_up(N, tn)

    def augment(bxyz):
        xyz = bxyz[:, 1:4]
        sq = jnp.sum(xyz * xyz, axis=1, keepdims=True)
        return jnp.concatenate([xyz, sq, bxyz[:, 0:1]], axis=1)            # [., 5]

    new_aug = jnp.pad(augment(new_bxyz), ((0, m_pad - M), (0, 0)))
    ptT_aug = jnp.pad(augment(point_bxyz), ((0, n_pad - N), (0, 0))).T     # [5, n_pad]

    idx, dst = pl.pallas_call(
        functools.partial(_knn_kernel, N, k),
        out_shape=(jax.ShapeDtypeStruct((m_pad, k), jnp.int32),
                   jax.ShapeDtypeStruct((m_pad, k), jnp.float32)),
        grid_spec=pltpu.PrefetchScalarGridSpec(
            num_scalar_prefetch=0,
            grid=(m_pad // tm, n_pad // tn),
            in_specs=[
                pl.BlockSpec((tm, 5), lambda i, j: (i, 0)),
                pl.BlockSpec((5, tn), lambda i, j: (0, j)),
            ],
            out_specs=(
                pl.BlockSpec((tm, k), lambda i, j: (i, 0)),
                pl.BlockSpec((tm, k), lambda i, j: (i, 0)),
            ),
            scratch_shapes=[
                pltpu.VMEM((tm, 128), jnp.float32),
                pltpu.VMEM((tm, 128), jnp.float32),
            ],
        ),
        compiler_params=pltpu.CompilerParams(
            dimension_semantics=("parallel", "arbitrary"),
            vmem_limit_bytes=_VMEM_LIMIT),
    )(new_aug, ptT_aug)
    return idx[:M], dst[:M]


# ---------------------------------------------------------------------------
# Kernel 2: per-point feature projection  feat_proj = point_feat @ W_feat  (bf16 out)
# ---------------------------------------------------------------------------
def _feat_proj_kernel(x_ref, w_ref, o_ref):
    x = x_ref[...].astype(jnp.bfloat16)
    w = w_ref[...].astype(jnp.bfloat16)
    o_ref[...] = jnp.dot(x, w, preferred_element_type=jnp.float32).astype(o_ref.dtype)


def feat_proj(point_feat, w_feat, *, tile_r=2048):
    N, C = point_feat.shape
    c_out = w_feat.shape[1]
    tr = min(tile_r, _round_up(N, 8))
    n_pad = _round_up(N, tr)
    x = jnp.pad(point_feat, ((0, n_pad - N), (0, 0)))
    out = pl.pallas_call(
        _feat_proj_kernel,
        out_shape=jax.ShapeDtypeStruct((n_pad, c_out), jnp.bfloat16),
        grid=(n_pad // tr,),
        in_specs=[
            pl.BlockSpec((tr, C), lambda i: (i, 0)),
            pl.BlockSpec((C, c_out), lambda i: (0, 0)),
        ],
        out_specs=pl.BlockSpec((tr, c_out), lambda i: (i, 0)),
        compiler_params=pltpu.CompilerParams(
            dimension_semantics=("parallel",),
            vmem_limit_bytes=_VMEM_LIMIT),
    )(x, w_feat)
    return out[:N]


# ---------------------------------------------------------------------------
# Kernel 3: per-edge xyz FMA + bias + relu, then masked max over K neighbors
# ---------------------------------------------------------------------------
def _edge_reduce_kernel(k, proj_ref, relx_ref, rely_ref, relz_ref, dst_ref,
                        w_ref, b_ref, o_ref):
    # proj_ref: [K, TM, C_out] bf16  gathered, pre-projected neighbor features
    # relx/y/z: [TM, K] f32          neighbor xyz - sampled xyz, per axis
    # dst_ref : [TM, K] f32          squared neighbor distances (+inf => invalid edge)
    # w_ref   : [3, C_out] f32       xyz rows of the EdgeConv weight
    # b_ref   : [1, C_out] f32
    # o_ref   : [TM, C_out] f32
    w0 = w_ref[0:1, :]
    w1 = w_ref[1:2, :]
    w2 = w_ref[2:3, :]
    b = b_ref[...]
    acc = jnp.zeros(o_ref.shape, jnp.float32)
    for j in range(k):                                       # K is small & static: unrolled
        pj = proj_ref[j].astype(jnp.float32)                 # [TM, C_out] (leading-axis index)
        y = (pj
             + relx_ref[:, j:j + 1] * w0
             + rely_ref[:, j:j + 1] * w1
             + relz_ref[:, j:j + 1] * w2
             + b)
        y = jnp.maximum(y, 0.0)                              # relu
        # Invalid neighbors contribute 0; since relu >= 0 they never win the max as long
        # as each sampled point has at least one valid neighbor (itself, distance 0).
        valid = dst_ref[:, j:j + 1] < _VALID_THRESH
        acc = jnp.maximum(acc, jnp.where(valid, y, 0.0))
    o_ref[...] = acc


def edge_conv_max(nbr_proj_kmc, relx, rely, relz, knn_dist, w_xyz, bias, *, tile_m=512):
    K, M, c_out = nbr_proj_kmc.shape
    tm = min(tile_m, _round_up(M, 8))
    m_pad = _round_up(M, tm)
    pm = m_pad - M
    nbr_proj_kmc = jnp.pad(nbr_proj_kmc, ((0, 0), (0, pm), (0, 0)))
    relx = jnp.pad(relx, ((0, pm), (0, 0)))
    rely = jnp.pad(rely, ((0, pm), (0, 0)))
    relz = jnp.pad(relz, ((0, pm), (0, 0)))
    knn_dist = jnp.pad(knn_dist, ((0, pm), (0, 0)), constant_values=_INF)
    out = pl.pallas_call(
        functools.partial(_edge_reduce_kernel, K),
        out_shape=jax.ShapeDtypeStruct((m_pad, c_out), jnp.float32),
        grid=(m_pad // tm,),
        in_specs=[
            pl.BlockSpec((K, tm, c_out), lambda i: (0, i, 0)),
            pl.BlockSpec((tm, K), lambda i: (i, 0)),
            pl.BlockSpec((tm, K), lambda i: (i, 0)),
            pl.BlockSpec((tm, K), lambda i: (i, 0)),
            pl.BlockSpec((tm, K), lambda i: (i, 0)),
            pl.BlockSpec((3, c_out), lambda i: (0, 0)),
            pl.BlockSpec((1, c_out), lambda i: (0, 0)),
        ],
        out_specs=pl.BlockSpec((tm, c_out), lambda i: (i, 0)),
        compiler_params=pltpu.CompilerParams(
            dimension_semantics=("parallel",),
            vmem_limit_bytes=_VMEM_LIMIT),
    )(nbr_proj_kmc, relx, rely, relz, knn_dist, w_xyz, bias)
    return out[:M]


# ---------------------------------------------------------------------------
# GraphConvDown forward
# ---------------------------------------------------------------------------
def graph_conv_down(point_bxyz, point_feat, weight, bias, *, stride=2, k=8):
    """point_bxyz [N,4], point_feat [N,C] -> (new_bxyz [M,4], new_feat [M,C_out])."""
    C = point_feat.shape[1]

    # sampler: deterministic stride subsample (stand-in for pcdet SAMPLERS registry).
    # TODO(synk): actual sampler type (e.g. FPS / grid sampler) not specified in snippet.
    new_bxyz = point_bxyz[::stride]                                # [M, 4]

    # grouper: fused batch-aware KNN (Pallas). Only [M,K] idx/dist ever reach HBM.
    knn_idx, knn_dist = knn(new_bxyz, point_bxyz, k)               # [M, K] x2

    # conv block (EdgeConv): the feature half of W is applied once per input point
    # (N rows) instead of once per edge; exact because the split is before the ReLU.
    w_feat, w_xyz = weight[:C], weight[C:]
    proj = feat_proj(point_feat, w_feat)                           # [N, C_out] bf16

    # gather glue (XLA) on bf16 features (half the HBM stream of f32).
    # TODO(synk): fully fusing this gather into the edge kernel (proj via pl.ANY +
    # per-row DMA / scalar-prefetched indices) would remove the remaining round trip.
    nbr_proj = jnp.take(proj, knn_idx.T, axis=0)                   # [K, M, C_out] bf16
    xyz = point_bxyz[:, 1:4]
    nbr_xyz = jnp.take(xyz, knn_idx, axis=0)                       # [M, K, 3]
    rel = nbr_xyz - new_bxyz[:, None, 1:4]                         # [M, K, 3]
    relx, rely, relz = rel[..., 0], rel[..., 1], rel[..., 2]       # [M, K] each

    new_feat = edge_conv_max(nbr_proj, relx, rely, relz, knn_dist, w_xyz, bias)
    return new_bxyz, new_feat


# ---------------------------------------------------------------------------
# Pure-JAX reference (for a lightweight sanity check)
# ---------------------------------------------------------------------------
def _reference(point_bxyz, point_feat, weight, bias, stride, k):
    new_bxyz = point_bxyz[::stride]
    xyz = point_bxyz[:, 1:4]
    b = point_bxyz[:, 0]
    nxyz = new_bxyz[:, 1:4]
    nb = new_bxyz[:, 0]
    d = jnp.sum((nxyz[:, None, :] - xyz[None, :, :]) ** 2, axis=-1)
    d = jnp.where(nb[:, None] != b[None, :], jnp.inf, d)
    neg_d, idx = jax.lax.top_k(-d, k)
    dist = -neg_d
    edge_x = jnp.concatenate(
        [point_feat[idx], xyz[idx] - nxyz[:, None, :]], axis=-1)          # [M, K, C+3]
    y = jnp.maximum(edge_x @ weight + bias, 0.0)
    y = jnp.where(jnp.isfinite(dist)[..., None], y, 0.0)
    return new_bxyz, jnp.max(y, axis=1)


if __name__ == "__main__":
    key = jax.random.PRNGKey(0)
    k_xyz, k_feat, k_w, k_b = jax.random.split(key, 4)

    N, C, C_OUT, K, STRIDE = 64, 8, 16, 8, 2
    B = 2

    # points: first half batch 0, second half batch 1
    batch_idx = jnp.repeat(jnp.arange(B, dtype=jnp.float32), N // B)[:, None]   # [N,1]
    xyz = jax.random.uniform(k_xyz, (N, 3), dtype=jnp.float32)
    point_bxyz = jnp.concatenate([batch_idx, xyz], axis=-1)                     # [N,4]
    point_feat = jax.random.normal(k_feat, (N, C), dtype=jnp.float32)           # [N,C]

    # deterministic conv params: Linear(C+3 -> C_OUT)
    D_in = C + 3
    weight = 0.1 * jax.random.normal(k_w, (D_in, C_OUT), dtype=jnp.float32)
    bias = 0.01 * jax.random.normal(k_b, (1, C_OUT), dtype=jnp.float32)

    new_bxyz, new_feat = graph_conv_down(
        point_bxyz, point_feat, weight, bias, stride=STRIDE, k=K)
    jax.block_until_ready((new_bxyz, new_feat))

    assert new_bxyz.shape == (N // STRIDE, 4)
    assert new_feat.shape == (N // STRIDE, C_OUT)

    ref_bxyz, ref_feat = _reference(point_bxyz, point_feat, weight, bias, STRIDE, K)
    assert jnp.allclose(new_bxyz, ref_bxyz)
    assert jnp.allclose(new_feat, ref_feat, atol=5e-2, rtol=5e-2), (
        float(jnp.max(jnp.abs(new_feat - ref_feat))))

    print("KERNEL_OK")
</pallas_src>

<mosaic_0001>
module attributes {stable_mosaic.version = 11 : i64} {
  func.func @_knn_kernel(%arg0: i32, %arg1: i32, %arg2: memref<32x5xf32, #tpu.memory_space<vmem>>, %arg3: memref<5x128xf32, #tpu.memory_space<vmem>>, %arg4: memref<32x8xi32, #tpu.memory_space<vmem>>, %arg5: memref<32x8xf32, #tpu.memory_space<vmem>>, %arg6: memref<32x128xf32, #tpu.memory_space<vmem>>, %arg7: memref<32x128xf32, #tpu.memory_space<vmem>>) attributes {dimension_semantics = [#tpu.dimension_semantics<parallel>, #tpu.dimension_semantics<arbitrary>], iteration_bounds = array<i64: 1, 1>, scalar_prefetch = 0 : i64, scratch_operands = 2 : i64, tpu.core_type = #tpu.core_type<tc>, window_params = [{transform_indices = @transform_0, window_bounds = array<i64: 32, 5>}, {transform_indices = @transform_1, window_bounds = array<i64: 5, 128>}, {transform_indices = @transform_2, window_bounds = array<i64: 32, 8>}, {transform_indices = @transform_3, window_bounds = array<i64: 32, 8>}]} {
    %c0_i32 = arith.constant 0 : i32
    %0 = arith.cmpi eq, %arg1, %c0_i32 : i32
    %1 = arith.extui %0 : i1 to i32
    %c0_i32_0 = arith.constant 0 : i32
    %2 = arith.cmpi ne, %1, %c0_i32_0 : i32
    scf.if %2 {
      %cst = arith.constant 0x7F800000 : f32
      %19 = vector.broadcast %cst : f32 to vector<32x128xf32>
      %c0_10 = arith.constant 0 : index
      %c0_11 = arith.constant 0 : index
      %20 = vector.load %arg6[%c0_10, %c0_11] : memref<32x128xf32, #tpu.memory_space<vmem>>, vector<32x128xf32>
      tpu.vector_store %arg6[%c0_10, %c0_11], %19 {strides = array<i32>} : memref<32x128xf32, #tpu.memory_space<vmem>>, vector<32x128xf32>,
      %cst_12 = arith.constant 0.000000e+00 : f32
      %21 = vector.broadcast %cst_12 : f32 to vector<32x128xf32>
      %c0_13 = arith.constant 0 : index
      %c0_14 = arith.constant 0 : index
      %22 = vector.load %arg7[%c0_13, %c0_14] : memref<32x128xf32, #tpu.memory_space<vmem>>, vector<32x128xf32>
      tpu.vector_store %arg7[%c0_13, %c0_14], %21 {strides = array<i32>} : memref<32x128xf32, #tpu.memory_space<vmem>>, vector<32x128xf32>,
    } else {
    }
    %c0 = arith.constant 0 : index
    %c0_1 = arith.constant 0 : index
    %3 = vector.load %arg3[%c0, %c0_1] : memref<5x128xf32, #tpu.memory_space<vmem>>, vector<1x128xf32>
    %c1 = arith.constant 1 : index
    %c0_2 = arith.constant 0 : index
    %4 = vector.load %arg3[%c1, %c0_2] : memref<5x128xf32, #tpu.memory_space<vmem>>, vector<1x128xf32>
    %c2 = arith.constant 2 : index
    %c0_3 = arith.constant 0 : index
    %5 = vector.load %arg3[%c2, %c0_3] : memref<5x128xf32, #tpu.memory_space<vmem>>, vector<1x128xf32>
    %c3 = arith.constant 3 : index
    %c0_4 = arith.constant 0 : index
    %6 = vector.load %arg3[%c3, %c0_4] : memref<5x128xf32, #tpu.memory_space<vmem>>, vector<1x128xf32>
    %c4 = arith.constant 4 : index
    %c0_5 = arith.constant 0 : index
    %7 = vector.load %arg3[%c4, %c0_5] : memref<5x128xf32, #tpu.memory_space<vmem>>, vector<1x128xf32>
    %8 = tpu.iota {dimensions = array<i32: 1>} : vector<8x128xi32>
    %c128_i32 = arith.constant 128 : i32
    %9 = arith.muli %arg1, %c128_i32 : i32
    %10 = vector.broadcast %9 : i32 to vector<8x128xi32>
    %11 = arith.addi %8, %10 : vector<8x128xi32>
    %12 = arith.sitofp %11 : vector<8x128xi32> to vector<8x128xf32>
    %c64_i32 = arith.constant 64 : i32
    %13 = vector.broadcast %c64_i32 : i32 to vector<8x128xi32>
    %14 = arith.cmpi sge, %11, %13 : vector<8x128xi32>
    %c0_i32_6 = arith.constant 0 : i32
    %c4_i32 = arith.constant 4 : i32
    %15 = arith.addi %c0_i32_6, %c4_i32 : i32
    %c1_i32 = arith.constant 1 : i32
    scf.for %arg8 = %c0_i32_6 to %15 step %c1_i32  : i32 {
      %c8_i32 = arith.constant 8 : i32
      %19 = arith.muli %arg8, %c8_i32 : i32
      %20 = tpu.assume_multiple %19, 8 : i32
      %21 = arith.index_cast %20 : i32 to index
      %c0_10 = arith.constant 0 : index
      %22 = vector.load %arg2[%21, %c0_10] : memref<32x5xf32, #tpu.memory_space<vmem>>, vector<8x5xf32>
      %23 = vector.extract_strided_slice %22 {offsets = [0, 0], sizes = [8, 1], strides = [1, 1]} : vector<8x5xf32> to vector<8x1xf32>
      %24 = vector.extract_strided_slice %22 {offsets = [0, 1], sizes = [8, 1], strides = [1, 1]} : vector<8x5xf32> to vector<8x1xf32>
      %25 = vector.extract_strided_slice %22 {offsets = [0, 2], sizes = [8, 1], strides = [1, 1]} : vector<8x5xf32> to vector<8x1xf32>
      %26 = vector.extract_strided_slice %22 {offsets = [0, 3], sizes = [8, 1], strides = [1, 1]} : vector<8x5xf32> to vector<8x1xf32>
      %27 = vector.extract_strided_slice %22 {offsets = [0, 4], sizes = [8, 1], strides = [1, 1]} : vector<8x5xf32> to vector<8x1xf32>
      %28 = vector.broadcast %23 : vector<8x1xf32> to vector<8x128xf32>
      %29 = vector.broadcast %3 : vector<1x128xf32> to vector<8x128xf32>
      %30 = arith.mulf %28, %29 : vector<8x128xf32>
      %31 = vector.broadcast %24 : vector<8x1xf32> to vector<8x128xf32>
      %32 = vector.broadcast %4 : vector<1x128xf32> to vector<8x128xf32>
      %33 = arith.mulf %31, %32 : vector<8x128xf32>
      %34 = arith.addf %30, %33 : vector<8x128xf32>
      %35 = vector.broadcast %25 : vector<8x1xf32> to vector<8x128xf32>
      %36 = vector.broadcast %5 : vector<1x128xf32> to vector<8x128xf32>
      %37 = arith.mulf %35, %36 : vector<8x128xf32>
      %38 = arith.addf %34, %37 : vector<8x128xf32>
      %39 = vector.broadcast %26 : vector<8x1xf32> to vector<8x128xf32>
      %40 = vector.broadcast %6 : vector<1x128xf32> to vector<8x128xf32>
      %41 = arith.addf %39, %40 : vector<8x128xf32>
      %cst = arith.constant 2.000000e+00 : f32
      %42 = vector.broadcast %cst : f32 to vector<8x128xf32>
      %43 = arith.mulf %42, %38 : vector<8x128xf32>
      %44 = arith.subf %41, %43 : vector<8x128xf32>
      %cst_11 = arith.constant 0.000000e+00 : f32
      %45 = vector.broadcast %cst_11 : f32 to vector<8x128xf32>
      %46 = arith.maximumf %44, %45 : vector<8x128xf32>
      %47 = vector.broadcast %27 : vector<8x1xf32> to vector<8x128xf32>
      %48 = vector.broadcast %7 : vector<1x128xf32> to vector<8x128xf32>
      %49 = arith.cmpf one, %47, %48 : vector<8x128xf32>
      %cst_12 = arith.constant 0x7F800000 : f32
      %50 = vector.broadcast %cst_12 : f32 to vector<8x128xf32>
      %51 = arith.select %49, %50, %46 : vector<8x128xi1>, vector<8x128xf32>
      %cst_13 = arith.constant 0x7F800000 : f32
      %52 = vector.broadcast %cst_13 : f32 to vector<8x128xf32>
      %53 = arith.select %14, %52, %51 : vector<8x128xi1>, vector<8x128xf32>
      %cst_14 = arith.constant dense<0x7F800000> : vector<8xf32>
      %54 = vector.multi_reduction <minimumf>, %53, %cst_14 [1] : vector<8x128xf32> to vector<8xf32>
      %55 = vector.shape_cast %54 : vector<8xf32> to vector<8x1xf32>
      %56 = vector.broadcast %55 : vector<8x1xf32> to vector<8x128xf32>
      %57 = arith.cmpf oeq, %53, %56 : vector<8x128xf32>
      %cst_15 = arith.constant 0x7F800000 : f32
      %58 = vector.broadcast %cst_15 : f32 to vector<8x128xf32>
      %59 = arith.select %57, %12, %58 : vector<8x128xi1>, vector<8x128xf32>
      %cst_16 = arith.constant dense<0x7F800000> : vector<8xf32>
      %60 = vector.multi_reduction <minimumf>, %59, %cst_16 [1] : vector<8x128xf32> to vector<8xf32>
      %61 = vector.shape_cast %60 : vector<8xf32> to vector<8x1xf32>
      %62 = arith.index_cast %20 : i32 to index
      %c8 = arith.constant 8 : index
      %63 = vector.load %arg6[%62, %c8] : memref<32x128xf32, #tpu.memory_space<vmem>>, vector<8x1xf32>
      tpu.vector_store %arg6[%62, %c8], %55 {strides = array<i32>} : memref<32x128xf32, #tpu.memory_space<vmem>>, vector<8x1xf32>,
      %64 = arith.index_cast %20 : i32 to index
      %c8_17 = arith.constant 8 : index
      %65 = vector.load %arg7[%64, %c8_17] : memref<32x128xf32, #tpu.memory_space<vmem>>, vector<8x1xf32>
      tpu.vector_store %arg7[%64, %c8_17], %61 {strides = array<i32>} : memref<32x128xf32, #tpu.memory_space<vmem>>, vector<8x1xf32>,
      %66 = vector.broadcast %61 : vector<8x1xf32> to vector<8x128xf32>
      %67 = arith.cmpf oeq, %12, %66 : vector<8x128xf32>
      %cst_18 = arith.constant 0x7F800000 : f32
      %68 = vector.broadcast %cst_18 : f32 to vector<8x128xf32>
      %69 = arith.select %67, %68, %53 : vector<8x128xi1>, vector<8x128xf32>
      %cst_19 = arith.constant dense<0x7F800000> : vector<8xf32>
      %70 = vector.multi_reduction <minimumf>, %69, %cst_19 [1] : vector<8x128xf32> to vector<8xf32>
      %71 = vector.shape_cast %70 : vector<8xf32> to vector<8x1xf32>
      %72 = vector.broadcast %71 : vector<8x1xf32> to vector<8x128xf32>
      %73 = arith.cmpf oeq, %69, %72 : vector<8x128xf32>
      %cst_20 = arith.constant 0x7F800000 : f32
      %74 = vector.broadcast %cst_20 : f32 to vector<8x128xf32>
      %75 = arith.select %73, %12, %74 : vector<8x128xi1>, vector<8x128xf32>
      %cst_21 = arith.constant dense<0x7F800000> : vector<8xf32>
      %76 = vector.multi_reduction <minimumf>, %75, %cst_21 [1] : vector<8x128xf32> to vector<8xf32>
      %77 = vector.shape_cast %76 : vector<8xf32> to vector<8x1xf32>
      %78 = arith.index_cast %20 : i32 to index
      %c9 = arith.constant 9 : index
      %79 = vector.load %arg6[%78, %c9] : memref<32x128xf32, #tpu.memory_space<vmem>>, vector<8x1xf32>
      tpu.vector_store %arg6[%78, %c9], %71 {strides = array<i32>} : memref<32x128xf32, #tpu.memory_space<vmem>>, vector<8x1xf32>,
      %80 = arith.index_cast %20 : i32 to index
      %c9_22 = arith.constant 9 : index
      %81 = vector.load %arg7[%80, %c9_22] : memref<32x128xf32, #tpu.memory_space<vmem>>, vector<8x1xf32>
      tpu.vector_store %arg7[%80, %c9_22], %77 {strides = array<i32>} : memref<32x128xf32, #tpu.memory_space<vmem>>, vector<8x1xf32>,
      %82 = vector.broadcast %77 : vector<8x1xf32> to vector<8x128xf32>
      %83 = arith.cmpf oeq, %12, %82 : vector<8x128xf32>
      %cst_23 = arith.constant 0x7F800000 : f32
      %84 = vector.broadcast %cst_23 : f32 to vector<8x128xf32>
      %85 = arith.select %83, %84, %69 : vector<8x128xi1>, vector<8x128xf32>
      %cst_24 = arith.constant dense<0x7F800000> : vector<8xf32>
      %86 = vector.multi_reduction <minimumf>, %85, %cst_24 [1] : vector<8x128xf32> to vector<8xf32>
      %87 = vector.shape_cast %86 : vector<8xf32> to vector<8x1xf32>
      %88 = vector.broadcast %87 : vector<8x1xf32> to vector<8x128xf32>
      %89 = arith.cmpf oeq, %85, %88 : vector<8x128xf32>
      %cst_25 = arith.constant 0x7F800000 : f32
      %90 = vector.broadcast %cst_25 : f32 to vector<8x128xf32>
      %91 = arith.select %89, %12, %90 : vector<8x128xi1>, vector<8x128xf32>
      %cst_26 = arith.constant dense<0x7F800000> : vector<8xf32>
      %92 = vector.multi_reduction <minimumf>, %91, %cst_26 [1] : vector<8x128xf32> to vector<8xf32>
      %93 = vector.shape_cast %92 : vector<8xf32> to vector<8x1xf32>
      %94 = arith.index_cast %20 : i32 to index
      %c10 = arith.constant 10 : index
      %95 = vector.load %arg6[%94, %c10] : memref<32x128xf32, #tpu.memory_space<vmem>>, vector<8x1xf32>
      tpu.vector_store %arg6[%94, %c10], %87 {strides = array<i32>} : memref<32x128xf32, #tpu.memory_space<vmem>>, vector<8x1xf32>,
      %96 = arith.index_cast %20 : i32 to index
      %c10_27 = arith.constant 10 : index
      %97 = vector.load %arg7[%96, %c10_27] : memref<32x128xf32, #tpu.memory_space<vmem>>, vector<8x1xf32>
      tpu.vector_store %arg7[%96, %c10_27], %93 {strides = array<i32>} : memref<32x128xf32, #tpu.memory_space<vmem>>, vector<8x1xf32>,
      %98 = vector.broadcast %93 : vector<8x1xf32> to vector<8x128xf32>
      %99 = arith.cmpf oeq, %12, %98 : vector<8x128xf32>
      %cst_28 = arith.constant 0x7F800000 : f32
      %100 = vector.broadcast %cst_28 : f32 to vector<8x128xf32>
      %101 = arith.select %99, %100, %85 : vector<8x128xi1>, vector<8x128xf32>
      %cst_29 = arith.constant dense<0x7F800000> : vector<8xf32>
      %102 = vector.multi_reduction <minimumf>, %101, %cst_29 [1] : vector<8x128xf32> to vector<8xf32>
      %103 = vector.shape_cast %102 : vector<8xf32> to vector<8x1xf32>
      %104 = vector.broadcast %103 : vector<8x1xf32> to vector<8x128xf32>
      %105 = arith.cmpf oeq, %101, %104 : vector<8x128xf32>
      %cst_30 = arith.constant 0x7F800000 : f32
      %106 = vector.broadcast %cst_30 : f32 to vector<8x128xf32>
      %107 = arith.select %105, %12, %106 : vector<8x128xi1>, vector<8x128xf32>
      %cst_31 = arith.constant dense<0x7F800000> : vector<8xf32>
      %108 = vector.multi_reduction <minimumf>, %107, %cst_31 [1] : vector<8x128xf32> to vector<8xf32>
      %109 = vector.shape_cast %108 : vector<8xf32> to vector<8x1xf32>
      %110 = arith.index_cast %20 : i32 to index
      %c11 = arith.constant 11 : index
      %111 = vector.load %arg6[%110, %c11] : memref<32x128xf32, #tpu.memory_space<vmem>>, vector<8x1xf32>
      tpu.vector_store %arg6[%110, %c11], %103 {strides = array<i32>} : memref<32x128xf32, #tpu.memory_space<vmem>>, vector<8x1xf32>,
      %112 = arith.index_cast %20 : i32 to index
      %c11_32 = arith.constant 11 : index
      %113 = vector.load %arg7[%112, %c11_32] : memref<32x128xf32, #tpu.memory_space<vmem>>, vector<8x1xf32>
      tpu.vector_store %arg7[%112, %c11_32], %109 {strides = array<i32>} : memref<32x128xf32, #tpu.memory_space<vmem>>, vector<8x1xf32>,
      %114 = vector.broadcast %109 : vector<8x1xf32> to vector<8x128xf32>
      %115 = arith.cmpf oeq, %12, %114 : vector<8x128xf32>
      %cst_33 = arith.constant 0x7F800000 : f32
      %116 = vector.broadcast %cst_33 : f32 to vector<8x128xf32>
      %117 = arith.select %115, %116, %101 : vector<8x128xi1>, vector<8x128xf32>
      %cst_34 = arith.constant dense<0x7F800000> : vector<8xf32>
      %118 = vector.multi_reduction <minimumf>, %117, %cst_34 [1] : vector<8x128xf32> to vector<8xf32>
      %119 = vector.shape_cast %118 : vector<8xf32> to vector<8x1xf32>
      %120 = vector.broadcast %119 : vector<8x1xf32> to vector<8x128xf32>
      %121 = arith.cmpf oeq, %117, %120 : vector<8x128xf32>
      %cst_35 = arith.constant 0x7F800000 : f32
      %122 = vector.broadcast %cst_35 : f32 to vector<8x128xf32>
      %123 = arith.select %121, %12, %122 : vector<8x128xi1>, vector<8x128xf32>
      %cst_36 = arith.constant dense<0x7F800000> : vector<8xf32>
      %124 = vector.multi_reduction <minimumf>, %123, %cst_36 [1] : vector<8x128xf32> to vector<8xf32>
      %125 = vector.shape_cast %124 : vector<8xf32> to vector<8x1xf32>
      %126 = arith.index_cast %20 : i32 to index
      %c12 = arith.constant 12 : index
      %127 = vector.load %arg6[%126, %c12] : memref<32x128xf32, #tpu.memory_space<vmem>>, vector<8x1xf32>
      tpu.vector_store %arg6[%126, %c12], %119 {strides = array<i32>} : memref<32x128xf32, #tpu.memory_space<vmem>>, vector<8x1xf32>,
      %128 = arith.index_cast %20 : i32 to index
      %c12_37 = arith.constant 12 : index
      %129 = vector.load %arg7[%128, %c12_37] : memref<32x128xf32, #tpu.memory_space<vmem>>, vector<8x1xf32>
      tpu.vector_store %arg7[%128, %c12_37], %125 {strides = array<i32>} : memref<32x128xf32, #tpu.memory_space<vmem>>, vector<8x1xf32>,
      %130 = vector.broadcast %125 : vector<8x1xf32> to vector<8x128xf32>
      %131 = arith.cmpf oeq, %12, %130 : vector<8x128xf32>
      %cst_38 = arith.constant 0x7F800000 : f32
      %132 = vector.broadcast %cst_38 : f32 to vector<8x128xf32>
      %133 = arith.select %131, %132, %117 : vector<8x128xi1>, vector<8x128xf32>
      %cst_39 = arith.constant dense<0x7F800000> : vector<8xf32>
      %134 = vector.multi_reduction <minimumf>, %133, %cst_39 [1] : vector<8x128xf32> to vector<8xf32>
      %135 = vector.shape_cast %134 : vector<8xf32> to vector<8x1xf32>
      %136 = vector.broadcast %135 : vector<8x1xf32> to vector<8x128xf32>
      %137 = arith.cmpf oeq, %133, %136 : vector<8x128xf32>
      %cst_40 = arith.constant 0x7F800000 : f32
      %138 = vector.broadcast %cst_40 : f32 to vector<8x128xf32>
      %139 = arith.select %137, %12, %138 : vector<8x128xi1>, vector<8x128xf32>
      %cst_41 = arith.constant dense<0x7F800000> : vector<8xf32>
      %140 = vector.multi_reduction <minimumf>, %139, %cst_41 [1] : vector<8x128xf32> to vector<8xf32>
      %141 = vector.shape_cast %140 : vector<8xf32> to vector<8x1xf32>
      %142 = arith.index_cast %20 : i32 to index
      %c13 = arith.constant 13 : index
      %143 = vector.load %arg6[%142, %c13] : memref<32x128xf32, #tpu.memory_space<vmem>>, vector<8x1xf32>
      tpu.vector_store %arg6[%142, %c13], %135 {strides = array<i32>} : memref<32x128xf32, #tpu.memory_space<vmem>>, vector<8x1xf32>,
      %144 = arith.index_cast %20 : i32 to index
      %c13_42 = arith.constant 13 : index
      %145 = vector.load %arg7[%144, %c13_42] : memref<32x128xf32, #tpu.memory_space<vmem>>, vector<8x1xf32>
      tpu.vector_store %arg7[%144, %c13_42], %141 {strides = array<i32>} : memref<32x128xf32, #tpu.memory_space<vmem>>, vector<8x1xf32>,
      %146 = vector.broadcast %141 : vector<8x1xf32> to vector<8x128xf32>
      %147 = arith.cmpf oeq, %12, %146 : vector<8x128xf32>
      %cst_43 = arith.constant 0x7F800000 : f32
      %148 = vector.broadcast %cst_43 : f32 to vector<8x128xf32>
      %149 = arith.select %147, %148, %133 : vector<8x128xi1>, vector<8x128xf32>
      %cst_44 = arith.constant dense<0x7F800000> : vector<8xf32>
      %150 = vector.multi_reduction <minimumf>, %149, %cst_44 [1] : vector<8x128xf32> to vector<8xf32>
      %151 = vector.shape_cast %150 : vector<8xf32> to vector<8x1xf32>
      %152 = vector.broadcast %151 : vector<8x1xf32> to vector<8x128xf32>
      %153 = arith.cmpf oeq, %149, %152 : vector<8x128xf32>
      %cst_45 = arith.constant 0x7F800000 : f32
      %154 = vector.broadcast %cst_45 : f32 to vector<8x128xf32>
      %155 = arith.select %153, %12, %154 : vector<8x128xi1>, vector<8x128xf32>
      %cst_46 = arith.constant dense<0x7F800000> : vector<8xf32>
      %156 = vector.multi_reduction <minimumf>, %155, %cst_46 [1] : vector<8x128xf32> to vector<8xf32>
      %157 = vector.shape_cast %156 : vector<8xf32> to vector<8x1xf32>
      %158 = arith.index_cast %20 : i32 to index
      %c14 = arith.constant 14 : index
      %159 = vector.load %arg6[%158, %c14] : memref<32x128xf32, #tpu.memory_space<vmem>>, vector<8x1xf32>
      tpu.vector_store %arg6[%158, %c14], %151 {strides = array<i32>} : memref<32x128xf32, #tpu.memory_space<vmem>>, vector<8x1xf32>,
      %160 = arith.index_cast %20 : i32 to index
      %c14_47 = arith.constant 14 : index
      %161 = vector.load %arg7[%160, %c14_47] : memref<32x128xf32, #tpu.memory_space<vmem>>, vector<8x1xf32>
      tpu.vector_store %arg7[%160, %c14_47], %157 {strides = array<i32>} : memref<32x128xf32, #tpu.memory_space<vmem>>, vector<8x1xf32>,
      %162 = vector.broadcast %157 : vector<8x1xf32> to vector<8x128xf32>
      %163 = arith.cmpf oeq, %12, %162 : vector<8x128xf32>
      %cst_48 = arith.constant 0x7F800000 : f32
      %164 = vector.broadcast %cst_48 : f32 to vector<8x128xf32>
      %165 = arith.select %163, %164, %149 : vector<8x128xi1>, vector<8x128xf32>
      %cst_49 = arith.constant dense<0x7F800000> : vector<8xf32>
      %166 = vector.multi_reduction <minimumf>, %165, %cst_49 [1] : vector<8x128xf32> to vector<8xf32>
      %167 = vector.shape_cast %166 : vector<8xf32> to vector<8x1xf32>
      %168 = vector.broadcast %167 : vector<8x1xf32> to vector<8x128xf32>
      %169 = arith.cmpf oeq, %165, %168 : vector<8x128xf32>
      %cst_50 = arith.constant 0x7F800000 : f32
      %170 = vector.broadcast %cst_50 : f32 to vector<8x128xf32>
      %171 = arith.select %169, %12, %170 : vector<8x128xi1>, vector<8x128xf32>
      %cst_51 = arith.constant dense<0x7F800000> : vector<8xf32>
      %172 = vector.multi_reduction <minimumf>, %171, %cst_51 [1] : vector<8x128xf32> to vector<8xf32>
      %173 = vector.shape_cast %172 : vector<8xf32> to vector<8x1xf32>
      %174 = arith.index_cast %20 : i32 to index
      %c15 = arith.constant 15 : index
      %175 = vector.load %arg6[%174, %c15] : memref<32x128xf32, #tpu.memory_space<vmem>>, vector<8x1xf32>
      tpu.vector_store %arg6[%174, %c15], %167 {strides = array<i32>} : memref<32x128xf32, #tpu.memory_space<vmem>>, vector<8x1xf32>,
      %176 = arith.index_cast %20 : i32 to index
      %c15_52 = arith.constant 15 : index
      %177 = vector.load %arg7[%176, %c15_52] : memref<32x128xf32, #tpu.memory_space<vmem>>, vector<8x1xf32>
      tpu.vector_store %arg7[%176, %c15_52], %173 {strides = array<i32>} : memref<32x128xf32, #tpu.memory_space<vmem>>, vector<8x1xf32>,
      %178 = arith.index_cast %20 : i32 to index
      %c0_53 = arith.constant 0 : index
      %179 = vector.load %arg6[%178, %c0_53] : memref<32x128xf32, #tpu.memory_space<vmem>>, vector<8x128xf32>
      %180 = arith.index_cast %20 : i32 to index
      %c0_54 = arith.constant 0 : index
      %181 = vector.load %arg7[%180, %c0_54] : memref<32x128xf32, #tpu.memory_space<vmem>>, vector<8x128xf32>
      %cst_55 = arith.constant dense<0x7F800000> : vector<8xf32>
      %182 = vector.multi_reduction <minimumf>, %179, %cst_55 [1] : vector<8x128xf32> to vector<8xf32>
      %183 = vector.shape_cast %182 : vector<8xf32> to vector<8x1xf32>
      %184 = vector.broadcast %183 : vector<8x1xf32> to vector<8x128xf32>
      %185 = arith.cmpf oeq, %179, %184 : vector<8x128xf32>
      %cst_56 = arith.constant 0x7F800000 : f32
      %186 = vector.broadcast %cst_56 : f32 to vector<8x128xf32>
      %187 = arith.select %185, %181, %186 : vector<8x128xi1>, vector<8x128xf32>
      %cst_57 = arith.constant dense<0x7F800000> : vector<8xf32>
      %188 = vector.multi_reduction <minimumf>, %187, %cst_57 [1] : vector<8x128xf32> to vector<8xf32>
      %189 = vector.shape_cast %188 : vector<8xf32> to vector<8x1xf32>
      %190 = vector.broadcast %189 : vector<8x1xf32> to vector<8x128xf32>
      %191 = arith.cmpf oeq, %181, %190 : vector<8x128xf32>
      %cst_58 = arith.constant 0x7F800000 : f32
      %192 = vector.broadcast %cst_58 : f32 to vector<8x128xf32>
      %193 = arith.select %191, %192, %179 : vector<8x128xi1>, vector<8x128xf32>
      %cst_59 = arith.constant dense<0x7F800000> : vector<8xf32>
      %194 = vector.multi_reduction <minimumf>, %193, %cst_59 [1] : vector<8x128xf32> to vector<8xf32>
      %195 = vector.shape_cast %194 : vector<8xf32> to vector<8x1xf32>
      %196 = vector.broadcast %195 : vector<8x1xf32> to vector<8x128xf32>
      %197 = arith.cmpf oeq, %193, %196 : vector<8x128xf32>
      %cst_60 = arith.constant 0x7F800000 : f32
      %198 = vector.broadcast %cst_60 : f32 to vector<8x128xf32>
      %199 = arith.select %197, %181, %198 : vector<8x128xi1>, vector<8x128xf32>
      %cst_61 = arith.constant dense<0x7F800000> : vector<8xf32>
      %200 = vector.multi_reduction <minimumf>, %199, %cst_61 [1] : vector<8x128xf32> to vector<8xf32>
      %201 = vector.shape_cast %200 : vector<8xf32> to vector<8x1xf32>
      %202 = vector.broadcast %201 : vector<8x1xf32> to vector<8x128xf32>
      %203 = arith.cmpf oeq, %181, %202 : vector<8x128xf32>
      %cst_62 = arith.constant 0x7F800000 : f32
      %204 = vector.broadcast %cst_62 : f32 to vector<8x128xf32>
      %205 = arith.select %203, %204, %193 : vector<8x128xi1>, vector<8x128xf32>
      %cst_63 = arith.constant dense<0x7F800000> : vector<8xf32>
      %206 = vector.multi_reduction <minimumf>, %205, %cst_63 [1] : vector<8x128xf32> to vector<8xf32>
      %207 = vector.shape_cast %206 : vector<8xf32> to vector<8x1xf32>
      %208 = vector.broadcast %207 : vector<8x1xf32> to vector<8x128xf32>
      %209 = arith.cmpf oeq, %205, %208 : vector<8x128xf32>
      %cst_64 = arith.constant 0x7F800000 : f32
      %210 = vector.broadcast %cst_64 : f32 to vector<8x128xf32>
      %211 = arith.select %209, %181, %210 : vector<8x128xi1>, vector<8x128xf32>
      %cst_65 = arith.constant dense<0x7F800000> : vector<8xf32>
      %212 = vector.multi_reduction <minimumf>, %211, %cst_65 [1] : vector<8x128xf32> to vector<8xf32>
      %213 = vector.shape_cast %212 : vector<8xf32> to vector<8x1xf32>
      %214 = vector.broadcast %213 : vector<8x1xf32> to vector<8x128xf32>
      %215 = arith.cmpf oeq, %181, %214 : vector<8x128xf32>
      %cst_66 = arith.constant 0x7F800000 : f32
      %216 = vector.broadcast %cst_66 : f32 to vector<8x128xf32>
      %217 = arith.select %215, %216, %205 : vector<8x128xi1>, vector<8x128xf32>
      %cst_67 = arith.constant dense<0x7F800000> : vector<8xf32>
      %218 = vector.multi_reduction <minimumf>, %217, %cst_67 [1] : vector<8x128xf32> to vector<8xf32>
      %219 = vector.shape_cast %218 : vector<8xf32> to vector<8x1xf32>
      %220 = vector.broadcast %219 : vector<8x1xf32> to vector<8x128xf32>
      %221 = arith.cmpf oeq, %217, %220 : vector<8x128xf32>
      %cst_68 = arith.constant 0x7F800000 : f32
      %222 = vector.broadcast %cst_68 : f32 to vector<8x128xf32>
      %223 = arith.select %221, %181, %222 : vector<8x128xi1>, vector<8x128xf32>
      %cst_69 = arith.constant dense<0x7F800000> : vector<8xf32>
      %224 = vector.multi_reduction <minimumf>, %223, %cst_69 [1] : vector<8x128xf32> to vector<8xf32>
      %225 = vector.shape_cast %224 : vector<8xf32> to vector<8x1xf32>
      %226 = vector.broadcast %225 : vector<8x1xf32> to vector<8x128xf32>
      %227 = arith.cmpf oeq, %181, %226 : vector<8x128xf32>
      %cst_70 = arith.constant 0x7F800000 : f32
      %228 = vector.broadcast %cst_70 : f32 to vector<8x128xf32>
      %229 = arith.select %227, %228, %217 : vector<8x128xi1>, vector<8x128xf32>
      %cst_71 = arith.constant dense<0x7F800000> : vector<8xf32>
      %230 = vector.multi_reduction <minimumf>, %229, %cst_71 [1] : vector<8x128xf32> to vector<8xf32>
      %231 = vector.shape_cast %230 : vector<8xf32> to vector<8x1xf32>
      %232 = vector.broadcast %231 : vector<8x1xf32> to vector<8x128xf32>
      %233 = arith.cmpf oeq, %229, %232 : vector<8x128xf32>
      %cst_72 = arith.constant 0x7F800000 : f32
      %234 = vector.broadcast %cst_72 : f32 to vector<8x128xf32>
      %235 = arith.select %233, %181, %234 : vector<8x128xi1>, vector<8x128xf32>
      %cst_73 = arith.constant dense<0x7F800000> : vector<8xf32>
      %236 = vector.multi_reduction <minimumf>, %235, %cst_73 [1] : vector<8x128xf32> to vector<8xf32>
      %237 = vector.shape_cast %236 : vector<8xf32> to vector<8x1xf32>
      %238 = vector.broadcast %237 : vector<8x1xf32> to vector<8x128xf32>
      %239 = arith.cmpf oeq, %181, %238 : vector<8x128xf32>
      %cst_74 = arith.constant 0x7F800000 : f32
      %240 = vector.broadcast %cst_74 : f32 to vector<8x128xf32>
      %241 = arith.select %239, %240, %229 : vector<8x128xi1>, vector<8x128xf32>
      %cst_75 = arith.constant dense<0x7F800000> : vector<8xf32>
      %242 = vector.multi_reduction <minimumf>, %241, %cst_75 [1] : vector<8x128xf32> to vector<8xf32>
      %243 = vector.shape_cast %242 : vector<8xf32> to vector<8x1xf32>
      %244 = vector.broadcast %243 : vector<8x1xf32> to vector<8x128xf32>
      %245 = arith.cmpf oeq, %241, %244 : vector<8x128xf32>
      %cst_76 = arith.constant 0x7F800000 : f32
      %246 = vector.broadcast %cst_76 : f32 to vector<8x128xf32>
      %247 = arith.select %245, %181, %246 : vector<8x128xi1>, vector<8x128xf32>
      %cst_77 = arith.constant dense<0x7F800000> : vector<8xf32>
      %248 = vector.multi_reduction <minimumf>, %247, %cst_77 [1] : vector<8x128xf32> to vector<8xf32>
      %249 = vector.shape_cast %248 : vector<8xf32> to vector<8x1xf32>
      %250 = vector.broadcast %249 : vector<8x1xf32> to vector<8x128xf32>
      %251 = arith.cmpf oeq, %181, %250 : vector<8x128xf32>
      %cst_78 = arith.constant 0x7F800000 : f32
      %252 = vector.broadcast %cst_78 : f32 to vector<8x128xf32>
      %253 = arith.select %251, %252, %241 : vector<8x128xi1>, vector<8x128xf32>
      %cst_79 = arith.constant dense<0x7F800000> : vector<8xf32>
      %254 = vector.multi_reduction <minimumf>, %253, %cst_79 [1] : vector<8x128xf32> to vector<8xf32>
      %255 = vector.shape_cast %254 : vector<8xf32> to vector<8x1xf32>
      %256 = vector.broadcast %255 : vector<8x1xf32> to vector<8x128xf32>
      %257 = arith.cmpf oeq, %253, %256 : vector<8x128xf32>
      %cst_80 = arith.constant 0x7F800000 : f32
      %258 = vector.broadcast %cst_80 : f32 to vector<8x128xf32>
      %259 = arith.select %257, %181, %258 : vector<8x128xi1>, vector<8x128xf32>
      %cst_81 = arith.constant dense<0x7F800000> : vector<8xf32>
      %260 = vector.multi_reduction <minimumf>, %259, %cst_81 [1] : vector<8x128xf32> to vector<8xf32>
      %261 = vector.shape_cast %260 : vector<8xf32> to vector<8x1xf32>
      %262 = vector.broadcast %261 : vector<8x1xf32> to vector<8x128xf32>
      %263 = arith.cmpf oeq, %181, %262 : vector<8x128xf32>
      %cst_82 = arith.constant 0x7F800000 : f32
      %264 = vector.broadcast %cst_82 : f32 to vector<8x128xf32>
      %265 = arith.select %263, %264, %253 : vector<8x128xi1>, vector<8x128xf32>
      %cst_83 = arith.constant dense<0x7F800000> : vector<8xf32>
      %266 = vector.multi_reduction <minimumf>, %265, %cst_83 [1] : vector<8x128xf32> to vector<8xf32>
      %267 = vector.shape_cast %266 : vector<8xf32> to vector<8x1xf32>
      %268 = vector.broadcast %267 : vector<8x1xf32> to vector<8x128xf32>
      %269 = arith.cmpf oeq, %265, %268 : vector<8x128xf32>
      %cst_84 = arith.constant 0x7F800000 : f32
      %270 = vector.broadcast %cst_84 : f32 to vector<8x128xf32>
      %271 = arith.select %269, %181, %270 : vector<8x128xi1>, vector<8x128xf32>
      %cst_85 = arith.constant dense<0x7F800000> : vector<8xf32>
      %272 = vector.multi_reduction <minimumf>, %271, %cst_85 [1] : vector<8x128xf32> to vector<8xf32>
      %273 = vector.shape_cast %272 : vector<8xf32> to vector<8x1xf32>
      %274 = arith.index_cast %20 : i32 to index
      %c0_86 = arith.constant 0 : index
      %275 = vector.load %arg6[%274, %c0_86] : memref<32x128xf32, #tpu.memory_space<vmem>>, vector<8x1xf32>
      tpu.vector_store %arg6[%274, %c0_86], %183 {strides = array<i32>} : memref<32x128xf32, #tpu.memory_space<vmem>>, vector<8x1xf32>,
      %276 = arith.index_cast %20 : i32 to index
      %c0_87 = arith.constant 0 : index
      %277 = vector.load %arg7[%276, %c0_87] : memref<32x128xf32, #tpu.memory_space<vmem>>, vector<8x1xf32>
      tpu.vector_store %arg7[%276, %c0_87], %189 {strides = array<i32>} : memref<32x128xf32, #tpu.memory_space<vmem>>, vector<8x1xf32>,
      %278 = arith.index_cast %20 : i32 to index
      %c1_88 = arith.constant 1 : index
      %279 = vector.load %arg6[%278, %c1_88] : memref<32x128xf32, #tpu.memory_space<vmem>>, vector<8x1xf32>
      tpu.vector_store %arg6[%278, %c1_88], %195 {strides = array<i32>} : memref<32x128xf32, #tpu.memory_space<vmem>>, vector<8x1xf32>,
      %280 = arith.index_cast %20 : i32 to index
      %c1_89 = arith.constant 1 : index
      %281 = vector.load %arg7[%280, %c1_89] : memref<32x128xf32, #tpu.memory_space<vmem>>, vector<8x1xf32>
      tpu.vector_store %arg7[%280, %c1_89], %201 {strides = array<i32>} : memref<32x128xf32, #tpu.memory_space<vmem>>, vector<8x1xf32>,
      %282 = arith.index_cast %20 : i32 to index
      %c2_90 = arith.constant 2 : index
      %283 = vector.load %arg6[%282, %c2_90] : memref<32x128xf32, #tpu.memory_space<vmem>>, vector<8x1xf32>
      tpu.vector_store %arg6[%282, %c2_90], %207 {strides = array<i32>} : memref<32x128xf32, #tpu.memory_space<vmem>>, vector<8x1xf32>,
      %284 = arith.index_cast %20 : i32 to index
      %c2_91 = arith.constant 2 : index
      %285 = vector.load %arg7[%284, %c2_91] : memref<32x128xf32, #tpu.memory_space<vmem>>, vector<8x1xf32>
      tpu.vector_store %arg7[%284, %c2_91], %213 {strides = array<i32>} : memref<32x128xf32, #tpu.memory_space<vmem>>, vector<8x1xf32>,
      %286 = arith.index_cast %20 : i32 to index
      %c3_92 = arith.constant 3 : index
      %287 = vector.load %arg6[%286, %c3_92] : memref<32x128xf32, #tpu.memory_space<vmem>>, vector<8x1xf32>
      tpu.vector_store %arg6[%286, %c3_92], %219 {strides = array<i32>} : memref<32x128xf32, #tpu.memory_space<vmem>>, vector<8x1xf32>,
      %288 = arith.index_cast %20 : i32 to index
      %c3_93 = arith.constant 3 : index
      %289 = vector.load %arg7[%288, %c3_93] : memref<32x128xf32, #tpu.memory_space<vmem>>, vector<8x1xf32>
      tpu.vector_store %arg7[%288, %c3_93], %225 {strides = array<i32>} : memref<32x128xf32, #tpu.memory_space<vmem>>, vector<8x1xf32>,
      %290 = arith.index_cast %20 : i32 to index
      %c4_94 = arith.constant 4 : index
      %291 = vector.load %arg6[%290, %c4_94] : memref<32x128xf32, #tpu.memory_space<vmem>>, vector<8x1xf32>
      tpu.vector_store %arg6[%290, %c4_94], %231 {strides = array<i32>} : memref<32x128xf32, #tpu.memory_space<vmem>>, vector<8x1xf32>,
      %292 = arith.index_cast %20 : i32 to index
      %c4_95 = arith.constant 4 : index
      %293 = vector.load %arg7[%292, %c4_95] : memref<32x128xf32, #tpu.memory_space<vmem>>, vector<8x1xf32>
      tpu.vector_store %arg7[%292, %c4_95], %237 {strides = array<i32>} : memref<32x128xf32, #tpu.memory_space<vmem>>, vector<8x1xf32>,
      %294 = arith.index_cast %20 : i32 to index
      %c5 = arith.constant 5 : index
      %295 = vector.load %arg6[%294, %c5] : memref<32x128xf32, #tpu.memory_space<vmem>>, vector<8x1xf32>
      tpu.vector_store %arg6[%294, %c5], %243 {strides = array<i32>} : memref<32x128xf32, #tpu.memory_space<vmem>>, vector<8x1xf32>,
      %296 = arith.index_cast %20 : i32 to index
      %c5_96 = arith.constant 5 : index
      %297 = vector.load %arg7[%296, %c5_96] : memref<32x128xf32, #tpu.memory_space<vmem>>, vector<8x1xf32>
      tpu.vector_store %arg7[%296, %c5_96], %249 {strides = array<i32>} : memref<32x128xf32, #tpu.memory_space<vmem>>, vector<8x1xf32>,
      %298 = arith.index_cast %20 : i32 to index
      %c6 = arith.constant 6 : index
      %299 = vector.load %arg6[%298, %c6] : memref<32x128xf32, #tpu.memory_space<vmem>>, vector<8x1xf32>
      tpu.vector_store %arg6[%298, %c6], %255 {strides = array<i32>} : memref<32x128xf32, #tpu.memory_space<vmem>>, vector<8x1xf32>,
      %300 = arith.index_cast %20 : i32 to index
      %c6_97 = arith.constant 6 : index
      %301 = vector.load %arg7[%300, %c6_97] : memref<32x128xf32, #tpu.memory_space<vmem>>, vector<8x1xf32>
      tpu.vector_store %arg7[%300, %c6_97], %261 {strides = array<i32>} : memref<32x128xf32, #tpu.memory_space<vmem>>, vector<8x1xf32>,
      %302 = arith.index_cast %20 : i32 to index
      %c7 = arith.constant 7 : index
      %303 = vector.load %arg6[%302, %c7] : memref<32x128xf32, #tpu.memory_space<vmem>>, vector<8x1xf32>
      tpu.vector_store %arg6[%302, %c7], %267 {strides = array<i32>} : memref<32x128xf32, #tpu.memory_space<vmem>>, vector<8x1xf32>,
      %304 = arith.index_cast %20 : i32 to index
      %c7_98 = arith.constant 7 : index
      %305 = vector.load %arg7[%304, %c7_98] : memref<32x128xf32, #tpu.memory_space<vmem>>, vector<8x1xf32>
      tpu.vector_store %arg7[%304, %c7_98], %273 {strides = array<i32>} : memref<32x128xf32, #tpu.memory_space<vmem>>, vector<8x1xf32>,
    }
    %c4_i32_7 = arith.constant 4 : i32
    %c0_i32_8 = arith.constant 0 : i32
    %16 = arith.cmpi eq, %arg1, %c0_i32_8 : i32
    %17 = arith.extui %16 : i1 to i32
    %c0_i32_9 = arith.constant 0 : i32
    %18 = arith.cmpi ne, %17, %c0_i32_9 : i32
    scf.if %18 {
      %c0_10 = arith.constant 0 : index
      %c0_11 = arith.constant 0 : index
      %19 = vector.load %arg7[%c0_10, %c0_11] : memref<32x128xf32, #tpu.memory_space<vmem>>, vector<32x8xf32>
      %20 = arith.fptosi %19 : vector<32x8xf32> to vector<32x8xi32>
      %c0_12 = arith.constant 0 : index
      %c0_13 = arith.constant 0 : index
      %21 = vector.load %arg4[%c0_12, %c0_13] : memref<32x8xi32, #tpu.memory_space<vmem>>, vector<32x8xi32>
      tpu.vector_store %arg4[%c0_12, %c0_13], %20 {strides = array<i32>} : memref<32x8xi32, #tpu.memory_space<vmem>>, vector<32x8xi32>,
      %c0_14 = arith.constant 0 : index
      %c0_15 = arith.constant 0 : index
      %22 = vector.load %arg6[%c0_14, %c0_15] : memref<32x128xf32, #tpu.memory_space<vmem>>, vector<32x8xf32>
      %c0_16 = arith.constant 0 : index
      %c0_17 = arith.constant 0 : index
      %23 = vector.load %arg5[%c0_16, %c0_17] : memref<32x8xf32, #tpu.memory_space<vmem>>, vector<32x8xf32>
      tpu.vector_store %arg5[%c0_16, %c0_17], %22 {strides = array<i32>} : memref<32x8xf32, #tpu.memory_space<vmem>>, vector<32x8xf32>,
    } else {
    }
    return
  }
  func.func @transform_0(%arg0: i32, %arg1: i32) -> (i32, i32) {
    %c0_i32 = arith.constant 0 : i32
    %c0_i32_0 = arith.constant 0 : i32
    return %arg0, %c0_i32 : i32, i32
  }
  func.func @transform_1(%arg0: i32, %arg1: i32) -> (i32, i32) {
    %c0_i32 = arith.constant 0 : i32
    %c0_i32_0 = arith.constant 0 : i32
    return %c0_i32, %arg1 : i32, i32
  }
  func.func @transform_2(%arg0: i32, %arg1: i32) -> (i32, i32) {
    %c0_i32 = arith.constant 0 : i32
    %c0_i32_0 = arith.constant 0 : i32
    return %arg0, %c0_i32 : i32, i32
  }
  func.func @transform_3(%arg0: i32, %arg1: i32) -> (i32, i32) {
    %c0_i32 = arith.constant 0 : i32
    %c0_i32_0 = arith.constant 0 : i32
    return %arg0, %c0_i32 : i32, i32
  }
}

</mosaic_0001>

<llo_original>
// kernel: tpu_custom_call.1
$region0: #{tpu_custom_call.1}
  #allocation0 [shape = 'u32[]', space=smem, size = 0x4, offset = 0x4, fixed_abs, tag = 'smem constant byte address 0x4 - core index']
  #allocation1 [shape = 'u32[144,128]{1,0:T(1,128)}', space=vmem, size = 0x12000, scoped, tag = 'internal scratch']
  #allocation2 [shape = 'f32[32,128]{1,0:T(8,128)}', space=vmem, size = 0x4000, scoped, tag = 'scratch operand']
  #allocation3 [shape = 'f32[32,128]{1,0:T(8,128)}', space=vmem, size = 0x4000, scoped, tag = 'scratch operand']
  %s0 = inlined_call_operand.vmem [shape: f32[32,5], index: 0, kind: input, shape index: {}]
  %s1 = inlined_call_operand.vmem [shape: f32[5,128], index: 1, kind: input, shape index: {}]
  %s2 = inlined_call_operand.vmem [shape: s32[32,8], index: 2, kind: output, shape index: {0}]
  %s3 = inlined_call_operand.vmem [shape: f32[32,8], index: 3, kind: output, shape index: {1}]
  %4 = xla_tuple %s2, %s3
  %s5 = sld [smem:[#allocation0]]
  $region41: #{tpu_custom_call.1} parent=0
    _
  %s7 = ssub.s32 1, %s5
  %s8 = scalar_select 0, %s7, %s5
  // Predicated region
  $region2: #{tpu_custom_call.1} parent=0 // pred_check
    _
  $region3: #{tpu_custom_call.1} parent=0 // pred_check_branch
    %10 = sbr.rel (0) target = $region5
  $region4: #{tpu_custom_call.1} parent=0 // pred_region
    _
  $region5: #{tpu_custom_call.1} parent=0 // pred_fallthru
    _
  // Predicated region
  $region6: #{tpu_custom_call.1} parent=0 // pred_check
    _
  $region7: #{tpu_custom_call.1} parent=0 // pred_check_branch
    %12 = sbr.rel (0) target = $region9
  $region8: #{tpu_custom_call.1} parent=0 // pred_region
    _
  $region9: #{tpu_custom_call.1} parent=0 // pred_fallthru
    _
  %p13 = scmp.eq.s32.totalorder 0, 0
  // Predicated region
  $region10: #{tpu_custom_call.1} parent=0 // pred_check
    %p14 = pneg %p13
  $region11: #{tpu_custom_call.1} parent=0 // pred_check_branch
    %16 = sbr.rel (%p14) target = $region13
  $region12: #{tpu_custom_call.1} parent=0 // pred_region
    %17 = vst [vmem:[#allocation2] sm:$0xff] inf
    %18 = vst [vmem:[#allocation2 + $0x8] sm:$0xff] inf
    %19 = vst [vmem:[#allocation2 + $0x10] sm:$0xff] inf
    %20 = vst [vmem:[#allocation2 + $0x18] sm:$0xff] inf
    %21 = vst [vmem:[#allocation3] sm:$0xff] 0.0
    %22 = vst [vmem:[#allocation3 + $0x8] sm:$0xff] 0.0
    %23 = vst [vmem:[#allocation3 + $0x10] sm:$0xff] 0.0
    %24 = vst [vmem:[#allocation3 + $0x18] sm:$0xff] 0.0
  $region13: #{tpu_custom_call.1} parent=0 // pred_fallthru
    _
  %v25 = vld [vmem:[%s1] sm:$0x1]
  %v26 = vld [vmem:[%s1 + $0x1] sm:$0x1]
  %v27 = vld [vmem:[%s1 + $0x2] sm:$0x1]
  %v28 = vld [vmem:[%s1 + $0x3] sm:$0x1]
  %v29 = vld [vmem:[%s1 + $0x4] sm:$0x1]
  %v30 = vlaneseq
  %v31 = vand.u32 %v30, 127
  %s32 = smul.u32 0, 128
  %v33 = vstv %s32
  %v34 = vadd.s32 %v31, %v33
  %v35 = vcvt.s32.f32 %v34
  %vm36 = vcmp.ge.s32.totalorder %v34, 64
  loop: start=0, step=1, limit=4
  $region14: #{tpu_custom_call.1} parent=0 // loop_pre_header
    _
  $region15: #{tpu_custom_call.1} parent=0 // loop_header
    %s38 = sphi 0, %s42
    %p39 = scmp.ge.s32.totalorder %s38, 4
  $region16: #{tpu_custom_call.1} parent=0 // loop_header_branch
    %41 = sbr.rel (%p39) target = $region20
  $region17: #{tpu_custom_call.1} parent=0 // loop_body
    %s43 = smul.u32 %s38, 8
    %s44 = scalar_lea.vmem %s0, %s43
    %v45 = vld [vmem:[%s44] sm:$0xff]
    %47 = vset.pattern.permute.xlu0 0
    %48 = vperm.xlu0 %47, %v45
    %v49 = vpop.permute.xlu0 %48
    %v51 = vlaneseq
    %v52 = vshrl.u32 %v51, 7
    %v53 = vsub.s32 0, %v52
    %v54 = vrot.slane %v25, %v53
    %v55 = vmul.f32 %v49, %v54
    %56 = vset.pattern.permute.xlu0 1
    %57 = vperm.xlu0 %56, %v45
    %v58 = vpop.permute.xlu0 %57
    %v60 = vlaneseq
    %v61 = vshrl.u32 %v60, 7
    %v62 = vsub.s32 0, %v61
    %v63 = vrot.slane %v26, %v62
    %v64 = vmul.f32 %v58, %v63
    %v65 = vadd.f32 %v55, %v64
    %66 = vset.pattern.permute.xlu0 2
    %67 = vperm.xlu0 %66, %v45
    %v68 = vpop.permute.xlu0 %67
    %v70 = vlaneseq
    %v71 = vshrl.u32 %v70, 7
    %v72 = vsub.s32 0, %v71
    %v73 = vrot.slane %v27, %v72
    %v74 = vmul.f32 %v68, %v73
    %v75 = vadd.f32 %v65, %v74
    %76 = vset.pattern.permute.xlu0 3
    %77 = vperm.xlu0 %76, %v45
    %v78 = vpop.permute.xlu0 %77
    %v80 = vlaneseq
    %v81 = vshrl.u32 %v80, 7
    %v82 = vsub.s32 0, %v81
    %v83 = vrot.slane %v28, %v82
    %v84 = vadd.f32 %v78, %v83
    %v85 = vmul.f32 %v75, 2.0
    %v86 = vsub.f32 %v84, %v85
    %v87 = vmax.f32 %v86, 0.0
    %88 = vset.pattern.permute.xlu0 4
    %89 = vperm.xlu0 %88, %v45
    %v90 = vpop.permute.xlu0 %89
    %v92 = vlaneseq
    %v93 = vshrl.u32 %v92, 7
    %v94 = vsub.s32 0, %v93
    %v95 = vrot.slane %v29, %v94
    %vm96 = vcmp.ne.f32.partialorder %v90, %v95
    %v97 = vsel %vm96, inf, %v87
    %v98 = vsel %vm36, inf, %v97
    %99 = vmin.xlane.f32.xlu0 %v98
    %v100 = vpop.xlane.xlu0 %99
    %vm101 = vcmp.eq.f32.partialorder %v98, %v100
    %v102 = vsel %vm101, %v35, inf
    %103 = vmin.xlane.f32.xlu0 %v102
    %v104 = vpop.xlane.xlu0 %103
    %s105 = scalar_lea.vmem [#allocation2], %s43
    %vm106 = vcmask 72768
    %107 = vst.msk [vmem:[%s105] sm:$0xff] %vm106, %v100
    %s108 = scalar_lea.vmem [#allocation3], %s43
    %109 = vst.msk [vmem:[%s108] sm:$0xff] %vm106, %v104
    %vm110 = vcmp.eq.f32.partialorder %v35, %v104
    %v111 = vsel %vm110, inf, %v98
    %112 = vmin.xlane.f32.xlu0 %v111
    %v113 = vpop.xlane.xlu0 %112
    %vm114 = vcmp.eq.f32.partialorder %v111, %v113
    %v115 = vsel %vm114, %v35, inf
    %116 = vmin.xlane.f32.xlu0 %v115
    %v117 = vpop.xlane.xlu0 %116
    %vm118 = vcmask 80968
    %119 = vst.msk [vmem:[%s105] sm:$0xff] %vm118, %v113
    %120 = vst.msk [vmem:[%s108] sm:$0xff] %vm118, %v117
    %vm121 = vcmp.eq.f32.partialorder %v35, %v117
    %v122 = vsel %vm121, inf, %v111
    %123 = vmin.xlane.f32.xlu0 %v122
    %v124 = vpop.xlane.xlu0 %123
    %vm125 = vcmp.eq.f32.partialorder %v122, %v124
    %v126 = vsel %vm125, %v35, inf
    %127 = vmin.xlane.f32.xlu0 %v126
    %v128 = vpop.xlane.xlu0 %127
    %vm129 = vcmask 89168
    %130 = vst.msk [vmem:[%s105] sm:$0xff] %vm129, %v124
    %131 = vst.msk [vmem:[%s108] sm:$0xff] %vm129, %v128
    %vm132 = vcmp.eq.f32.partialorder %v35, %v128
    %v133 = vsel %vm132, inf, %v122
    %134 = vmin.xlane.f32.xlu0 %v133
    %v135 = vpop.xlane.xlu0 %134
    %vm136 = vcmp.eq.f32.partialorder %v133, %v135
    %v137 = vsel %vm136, %v35, inf
    %138 = vmin.xlane.f32.xlu0 %v137
    %v139 = vpop.xlane.xlu0 %138
    %vm140 = vcmask 97368
    %141 = vst.msk [vmem:[%s105] sm:$0xff] %vm140, %v135
    %142 = vst.msk [vmem:[%s108] sm:$0xff] %vm140, %v139
    %vm143 = vcmp.eq.f32.partialorder %v35, %v139
    %v144 = vsel %vm143, inf, %v133
    %145 = vmin.xlane.f32.xlu0 %v144
    %v146 = vpop.xlane.xlu0 %145
    %vm147 = vcmp.eq.f32.partialorder %v144, %v146
    %v148 = vsel %vm147, %v35, inf
    %149 = vmin.xlane.f32.xlu0 %v148
    %v150 = vpop.xlane.xlu0 %149
    %vm151 = vcmask 105568
    %152 = vst.msk [vmem:[%s105] sm:$0xff] %vm151, %v146
    %153 = vst.msk [vmem:[%s108] sm:$0xff] %vm151, %v150
    %vm154 = vcmp.eq.f32.partialorder %v35, %v150
    %v155 = vsel %vm154, inf, %v144
    %156 = vmin.xlane.f32.xlu0 %v155
    %v157 = vpop.xlane.xlu0 %156
    %vm158 = vcmp.eq.f32.partialorder %v155, %v157
    %v159 = vsel %vm158, %v35, inf
    %160 = vmin.xlane.f32.xlu0 %v159
    %v161 = vpop.xlane.xlu0 %160
    %vm162 = vcmask 113768
    %163 = vst.msk [vmem:[%s105] sm:$0xff] %vm162, %v157
    %164 = vst.msk [vmem:[%s108] sm:$0xff] %vm162, %v161
    %vm165 = vcmp.eq.f32.partialorder %v35, %v161
    %v166 = vsel %vm165, inf, %v155
    %167 = vmin.xlane.f32.xlu0 %v166
    %v168 = vpop.xlane.xlu0 %167
    %vm169 = vcmp.eq.f32.partialorder %v166, %v168
    %v170 = vsel %vm169, %v35, inf
    %171 = vmin.xlane.f32.xlu0 %v170
    %v172 = vpop.xlane.xlu0 %171
    %vm173 = vcmask 121968
    %174 = vst.msk [vmem:[%s105] sm:$0xff] %vm173, %v168
    %175 = vst.msk [vmem:[%s108] sm:$0xff] %vm173, %v172
    %vm176 = vcmp.eq.f32.partialorder %v35, %v172
    %v177 = vsel %vm176, inf, %v166
    %178 = vmin.xlane.f32.xlu0 %v177
    %v179 = vpop.xlane.xlu0 %178
    %vm180 = vcmp.eq.f32.partialorder %v177, %v179
    %v181 = vsel %vm180, %v35, inf
    %182 = vmin.xlane.f32.xlu0 %v181
    %v183 = vpop.xlane.xlu0 %182
    %vm184 = vcmask 130168
    %185 = vst.msk [vmem:[%s105] sm:$0xff] %vm184, %v179
    %186 = vst.msk [vmem:[%s108] sm:$0xff] %vm184, %v183
    %v187 = vld [vmem:[%s105] sm:$0xff]
    %v188 = vld [vmem:[%s108] sm:$0xff]
    %189 = vmin.xlane.f32.xlu0 %v187
    %v190 = vpop.xlane.xlu0 %189
    %vm191 = vcmp.eq.f32.partialorder %v187, %v190
    %v192 = vsel %vm191, %v188, inf
    %193 = vmin.xlane.f32.xlu0 %v192
    %v194 = vpop.xlane.xlu0 %193
    %vm195 = vcmp.eq.f32.partialorder %v188, %v194
    %v196 = vsel %vm195, inf, %v187
    %197 = vmin.xlane.f32.xlu0 %v196
    %v198 = vpop.xlane.xlu0 %197
    %vm199 = vcmp.eq.f32.partialorder %v196, %v198
    %v200 = vsel %vm199, %v188, inf
    %201 = vmin.xlane.f32.xlu0 %v200
    %v202 = vpop.xlane.xlu0 %201
    %vm203 = vcmp.eq.f32.partialorder %v188, %v202
    %v204 = vsel %vm203, inf, %v196
    %205 = vmin.xlane.f32.xlu0 %v204
    %v206 = vpop.xlane.xlu0 %205
    %vm207 = vcmp.eq.f32.partialorder %v204, %v206
    %v208 = vsel %vm207, %v188, inf
    %209 = vmin.xlane.f32.xlu0 %v208
    %v210 = vpop.xlane.xlu0 %209
    %vm211 = vcmp.eq.f32.partialorder %v188, %v210
    %v212 = vsel %vm211, inf, %v204
    %213 = vmin.xlane.f32.xlu0 %v212
    %v214 = vpop.xlane.xlu0 %213
    %vm215 = vcmp.eq.f32.partialorder %v212, %v214
    %v216 = vsel %vm215, %v188, inf
    %217 = vmin.xlane.f32.xlu0 %v216
    %v218 = vpop.xlane.xlu0 %217
    %vm219 = vcmp.eq.f32.partialorder %v188, %v218
    %v220 = vsel %vm219, inf, %v212
    %221 = vmin.xlane.f32.xlu0 %v220
    %v222 = vpop.xlane.xlu0 %221
    %vm223 = vcmp.eq.f32.partialorder %v220, %v222
    %v224 = vsel %vm223, %v188, inf
    %225 = vmin.xlane.f32.xlu0 %v224
    %v226 = vpop.xlane.xlu0 %225
    %vm227 = vcmp.eq.f32.partialorder %v188, %v226
    %v228 = vsel %vm227, inf, %v220
    %229 = vmin.xlane.f32.xlu0 %v228
    %v230 = vpop.xlane.xlu0 %229
    %vm231 = vcmp.eq.f32.partialorder %v228, %v230
    %v232 = vsel %vm231, %v188, inf
    %233 = vmin.xlane.f32.xlu0 %v232
    %v234 = vpop.xlane.xlu0 %233
    %vm235 = vcmp.eq.f32.partialorder %v188, %v234
    %v236 = vsel %vm235, inf, %v228
    %237 = vmin.xlane.f32.xlu0 %v236
    %v238 = vpop.xlane.xlu0 %237
    %vm239 = vcmp.eq.f32.partialorder %v236, %v238
    %v240 = vsel %vm239, %v188, inf
    %241 = vmin.xlane.f32.xlu0 %v240
    %v242 = vpop.xlane.xlu0 %241
    %vm243 = vcmp.eq.f32.partialorder %v188, %v242
    %v244 = vsel %vm243, inf, %v236
    %245 = vmin.xlane.f32.xlu0 %v244
    %v246 = vpop.xlane.xlu0 %245
    %vm247 = vcmp.eq.f32.partialorder %v244, %v246
    %v248 = vsel %vm247, %v188, inf
    %249 = vmin.xlane.f32.xlu0 %v248
    %v250 = vpop.xlane.xlu0 %249
    %vm251 = vcmask 7168
    %252 = vst.msk [vmem:[%s105] sm:$0xff] %vm251, %v190
    %253 = vst.msk [vmem:[%s108] sm:$0xff] %vm251, %v194
    %vm254 = vcmask 15368
    %255 = vst.msk [vmem:[%s105] sm:$0xff] %vm254, %v198
    %256 = vst.msk [vmem:[%s108] sm:$0xff] %vm254, %v202
    %vm257 = vcmask 23568
    %258 = vst.msk [vmem:[%s105] sm:$0xff] %vm257, %v206
    %259 = vst.msk [vmem:[%s108] sm:$0xff] %vm257, %v210
    %vm260 = vcmask 31768
    %261 = vst.msk [vmem:[%s105] sm:$0xff] %vm260, %v214
    %262 = vst.msk [vmem:[%s108] sm:$0xff] %vm260, %v218
    %vm263 = vcmask 39968
    %264 = vst.msk [vmem:[%s105] sm:$0xff] %vm263, %v222
    %265 = vst.msk [vmem:[%s108] sm:$0xff] %vm263, %v226
    %vm266 = vcmask 48168
    %267 = vst.msk [vmem:[%s105] sm:$0xff] %vm266, %v230
    %268 = vst.msk [vmem:[%s108] sm:$0xff] %vm266, %v234
    %vm269 = vcmask 56368
    %270 = vst.msk [vmem:[%s105] sm:$0xff] %vm269, %v238
    %271 = vst.msk [vmem:[%s108] sm:$0xff] %vm269, %v242
    %vm272 = vcmask 64568
    %273 = vst.msk [vmem:[%s105] sm:$0xff] %vm272, %v246
    %274 = vst.msk [vmem:[%s108] sm:$0xff] %vm272, %v250
  $region18: #{tpu_custom_call.1} parent=0 // loop_footer
    %s42 = sadd.s32 1, %s38
  $region19: #{tpu_custom_call.1} parent=0 // loop_footer_branch
    %37 = sbr.rel target = $region15
  $region20: #{tpu_custom_call.1} parent=0 // loop_exit
    _
  // Predicated region
  $region21: #{tpu_custom_call.1} parent=0 // pred_check
    %p275 = pneg %p13
  $region22: #{tpu_custom_call.1} parent=0 // pred_check_branch
    %277 = sbr.rel (%p275) target = $region24
  $region23: #{tpu_custom_call.1} parent=0 // pred_region
    %v278 = vld [vmem:[#allocation3] sm:$0xff]
    %v279 = vld [vmem:[#allocation3 + $0x8] sm:$0xff]
    %v280 = vld [vmem:[#allocation3 + $0x10] sm:$0xff]
    %v281 = vld [vmem:[#allocation3 + $0x18] sm:$0xff]
    %v282 = vcvt.f32.s32.to.zero.pseudo %v278
    %v283 = vcvt.f32.s32.to.zero.pseudo %v279
    %v284 = vcvt.f32.s32.to.zero.pseudo %v280
    %v285 = vcvt.f32.s32.to.zero.pseudo %v281
    %vm286 = vcmask 64512
    %287 = vst.msk [vmem:[%s2] sm:$0xff] %vm286, %v282
    %288 = vst.msk [vmem:[%s2 + $0x8] sm:$0xff] %vm286, %v283
    %289 = vst.msk [vmem:[%s2 + $0x10] sm:$0xff] %vm286, %v284
    %290 = vst.msk [vmem:[%s2 + $0x18] sm:$0xff] %vm286, %v285
    %v291 = vld [vmem:[#allocation2] sm:$0xff]
    %v292 = vld [vmem:[#allocation2 + $0x8] sm:$0xff]
    %v293 = vld [vmem:[#allocation2 + $0x10] sm:$0xff]
    %v294 = vld [vmem:[#allocation2 + $0x18] sm:$0xff]
    %295 = vst.msk [vmem:[%s3] sm:$0xff] %vm286, %v291
    %296 = vst.msk [vmem:[%s3 + $0x8] sm:$0xff] %vm286, %v292
    %297 = vst.msk [vmem:[%s3 + $0x10] sm:$0xff] %vm286, %v293
    %298 = vst.msk [vmem:[%s3 + $0x18] sm:$0xff] %vm286, %v294
  $region24: #{tpu_custom_call.1} parent=0 // pred_fallthru
    _
  // Predicated region
  $region25: #{tpu_custom_call.1} parent=0 // pred_check
    _
  $region26: #{tpu_custom_call.1} parent=0 // pred_check_branch
    %300 = sbr.rel (0) target = $region28
  $region27: #{tpu_custom_call.1} parent=0 // pred_region
    _
  $region28: #{tpu_custom_call.1} parent=0 // pred_fallthru
    _
  // Predicated region
  $region29: #{tpu_custom_call.1} parent=0 // pred_check
    _
  $region30: #{tpu_custom_call.1} parent=0 // pred_check_branch
    %302 = sbr.rel (0) target = $region32
  $region31: #{tpu_custom_call.1} parent=0 // pred_region
    _
  $region32: #{tpu_custom_call.1} parent=0 // pred_fallthru
    _
  // Predicated region
  $region33: #{tpu_custom_call.1} parent=0 // pred_check
    _
  $region34: #{tpu_custom_call.1} parent=0 // pred_check_branch
    %304 = sbr.rel (0) target = $region36
  $region35: #{tpu_custom_call.1} parent=0 // pred_region
    _
  $region36: #{tpu_custom_call.1} parent=0 // pred_fallthru
    _
  // Predicated region
  $region37: #{tpu_custom_call.1} parent=0 // pred_check
    _
  $region38: #{tpu_custom_call.1} parent=0 // pred_check_branch
    %306 = sbr.rel (0) target = $region40
  $region39: #{tpu_custom_call.1} parent=0 // pred_region
    _
  $region40: #{tpu_custom_call.1} parent=0 // pred_fallthru
    _

</llo_original>
